<compile_context>
chip_gen: v6e
topology: v6e:2x2x1
jax: 0.10.0
libtpu: 0.0.40
codegen_flags: <defaults>
</compile_context>

<pallas_src>
import jax
import jax.numpy as jnp
from jax.experimental import pallas as pl
from jax.experimental.pallas import tpu as pltpu

IN_DIM = 10
HID_DIM = 16
TILE_B_MAX = 4096  # (10, 4096) f32 tile = 160 KB -> trivially double-buffered


def simple_model_kernel(x_ref, w1_ref, b1_ref, wm_ref, bm_ref, w2_ref, b2_ref,
                        o_ref):
    """One batch tile. Activations are (features, batch) -> batch on lanes."""
    x = x_ref[...]                                                    # (10, T)
    h = jnp.dot(w1_ref[...], x, preferred_element_type=jnp.float32)   # (16, T)
    h = jnp.maximum(h + b1_ref[...], 0.0)                             # ReLU
    g = jnp.dot(wm_ref[...], h, preferred_element_type=jnp.float32)   # (16, T)
    g = jnp.maximum(g + bm_ref[...], 0.0)                             # ReLU
    y = jnp.dot(w2_ref[...], g, preferred_element_type=jnp.float32)   # (10, T)
    o_ref[...] = (y + b2_ref[...]).astype(o_ref.dtype)


def _pure_jax_forward(x, p):
    """Tiny-batch fast path (same math/association as the kernel)."""
    h = jnp.maximum(x @ p["w1a"].T + p["b1a"].T, 0.0)
    g = jnp.maximum(h @ p["w_mid"].T + p["b_mid"].T, 0.0)
    return g @ p["w2b"].T + p["b2b"].T


def simple_model_forward(x, params, tile_b=None):
    """x: (B, 10) float32. Returns (B, 10)."""
    B = x.shape[0]

    # Tiny batches: pallas_call launch + DMA setup dwarfs the ~5 KFLOPs of work.
    if tile_b is None and B < 128:
        return _pure_jax_forward(x, params)

    if tile_b is None:
        bp128 = 128 * pl.cdiv(B, 128)          # lane-dense tiles (multiple of 128)
        tile_b = min(bp128, TILE_B_MAX)
    n_tiles = pl.cdiv(B, tile_b)
    Bp = tile_b * n_tiles

    # Batch-on-lanes layout; pad batch up to a whole number of tiles.
    xt = x.T                                    # (10, B)
    if Bp != B:
        xt = jnp.pad(xt, ((0, 0), (0, Bp - B)))

    w1, b1 = params["w1a"], params["b1a"]       # (16,10), (16,1)
    wm, bm = params["w_mid"], params["b_mid"]   # (16,16), (16,1)
    w2, b2 = params["w2b"], params["b2b"]       # (10,16), (10,1)

    def resident(arr):
        # Whole-array block, same block every step -> stays VMEM-resident.
        return pl.BlockSpec(arr.shape, lambda i: (0, 0))

    out_t = pl.pallas_call(
        simple_model_kernel,
        out_shape=jax.ShapeDtypeStruct((IN_DIM, Bp), x.dtype),
        grid=(n_tiles,),
        in_specs=[
            pl.BlockSpec((IN_DIM, tile_b), lambda i: (0, i)),   # x tile
            resident(w1), resident(b1),
            resident(wm), resident(bm),
            resident(w2), resident(b2),
        ],
        out_specs=pl.BlockSpec((IN_DIM, tile_b), lambda i: (0, i)),
        compiler_params=pltpu.CompilerParams(
            dimension_semantics=("parallel",)),
    )(xt, w1, b1, wm, bm, w2, b2)

    return out_t[:, :B].T


def init_params(key):
    """Deterministic synthetic parameters matching MLPModule shapes.

    Weights are kept in the PyTorch (out_features, in_features) convention,
    which is exactly what the batch-on-lanes kernel wants (W @ x).  Biases are
    (out_features, 1) so they broadcast along the lane (batch) axis.
    """
    ks = jax.random.split(key, 8)

    def linear(kw, kb, fan_in, fan_out):
        bound = 1.0 / jnp.sqrt(fan_in)
        w = jax.random.uniform(kw, (fan_out, fan_in), jnp.float32, -bound, bound)
        b = jax.random.uniform(kb, (fan_out,), jnp.float32, -bound, bound)
        return w, b.reshape(fan_out, 1)

    w1a, b1a = linear(ks[0], ks[1], IN_DIM, HID_DIM)
    w2a, b2a = linear(ks[2], ks[3], HID_DIM, IN_DIM)
    w1b, b1b = linear(ks[4], ks[5], IN_DIM, HID_DIM)
    w2b, b2b = linear(ks[6], ks[7], HID_DIM, IN_DIM)

    # Fuse the two adjacent Linears (no activation between them):
    #   W1b @ (W2a @ h + b2a) + b1b == (W1b @ W2a) @ h + (W1b @ b2a + b1b)
    w_mid = w1b @ w2a            # (16, 16)
    b_mid = w1b @ b2a + b1b      # (16, 1)

    return dict(w1a=w1a, b1a=b1a, w2a=w2a, b2a=b2a,
                w1b=w1b, b1b=b1b, w2b=w2b, b2b=b2b,
                w_mid=w_mid, b_mid=b_mid)


def reference_forward(x, p):
    """Unfused pure-JAX reference matching the PyTorch module exactly."""
    def mlp(x, w1, b1, w2, b2):
        h = jnp.maximum(x @ w1.T + b1.T, 0.0)
        return h @ w2.T + b2.T
    h = mlp(x, p["w1a"], p["b1a"], p["w2a"], p["b2a"])
    return mlp(h, p["w1b"], p["b1b"], p["w2b"], p["b2b"])


if __name__ == "__main__":
    key = jax.random.PRNGKey(0)
    k_x, k_p = jax.random.split(key)

    batch = 256
    x = jax.random.normal(k_x, (batch, IN_DIM), jnp.float32)
    params = init_params(k_p)

    # tile_b=128 here so this small test exercises a multi-step (grid=2) batch
    # grid with resident weights; production default (tile_b=None) auto-picks
    # lane-dense tiles up to 4096 wide.
    out = simple_model_forward(x, params, tile_b=128)
    out = jax.block_until_ready(out)

    ref = reference_forward(x, params)
    assert out.shape == (batch, IN_DIM)
    assert jnp.allclose(out, ref, atol=1e-5, rtol=1e-5), \
        float(jnp.max(jnp.abs(out - ref)))
    print("KERNEL_OK")
</pallas_src>

<mosaic_0001>
module attributes {stable_mosaic.version = 11 : i64} {
  func.func @simple_model_kernel(%arg0: i32, %arg1: memref<10x128xf32, #tpu.memory_space<vmem>>, %arg2: memref<16x10xf32, #tpu.memory_space<vmem>>, %arg3: memref<16x1xf32, #tpu.memory_space<vmem>>, %arg4: memref<16x16xf32, #tpu.memory_space<vmem>>, %arg5: memref<16x1xf32, #tpu.memory_space<vmem>>, %arg6: memref<10x16xf32, #tpu.memory_space<vmem>>, %arg7: memref<10x1xf32, #tpu.memory_space<vmem>>, %arg8: memref<10x128xf32, #tpu.memory_space<vmem>>) attributes {dimension_semantics = [#tpu.dimension_semantics<parallel>], iteration_bounds = array<i64: 2>, scalar_prefetch = 0 : i64, scratch_operands = 0 : i64, tpu.core_type = #tpu.core_type<tc>, window_params = [{transform_indices = @transform_0, window_bounds = array<i64: 10, 128>}, {pipeline_mode = #tpu.pipeline_mode<synchronous>, transform_indices = @transform_1, window_bounds = array<i64: 16, 10>}, {pipeline_mode = #tpu.pipeline_mode<synchronous>, transform_indices = @transform_2, window_bounds = array<i64: 16, 1>}, {pipeline_mode = #tpu.pipeline_mode<synchronous>, transform_indices = @transform_3, window_bounds = array<i64: 16, 16>}, {pipeline_mode = #tpu.pipeline_mode<synchronous>, transform_indices = @transform_4, window_bounds = array<i64: 16, 1>}, {pipeline_mode = #tpu.pipeline_mode<synchronous>, transform_indices = @transform_5, window_bounds = array<i64: 10, 16>}, {pipeline_mode = #tpu.pipeline_mode<synchronous>, transform_indices = @transform_6, window_bounds = array<i64: 10, 1>}, {transform_indices = @transform_7, window_bounds = array<i64: 10, 128>}]} {
    %c0 = arith.constant 0 : index
    %c0_0 = arith.constant 0 : index
    %0 = vector.load %arg1[%c0, %c0_0] : memref<10x128xf32, #tpu.memory_space<vmem>>, vector<10x128xf32>
    %c0_1 = arith.constant 0 : index
    %c0_2 = arith.constant 0 : index
    %1 = vector.load %arg2[%c0_1, %c0_2] : memref<16x10xf32, #tpu.memory_space<vmem>>, vector<16x10xf32>
    %cst = arith.constant dense<0.000000e+00> : vector<16x128xf32>
    %2 = tpu.matmul %1, %0, %cst {dimension_numbers = #tpu.dot_dimension_numbers<[1], [0], [0], [1], [0, 0, 1, 1], [], []>} : vector<16x10xf32>, vector<10x128xf32>, vector<16x128xf32> -> vector<16x128xf32>
    %c0_3 = arith.constant 0 : index
    %c0_4 = arith.constant 0 : index
    %3 = vector.load %arg3[%c0_3, %c0_4] : memref<16x1xf32, #tpu.memory_space<vmem>>, vector<16x1xf32>
    %4 = vector.broadcast %3 : vector<16x1xf32> to vector<16x128xf32>
    %5 = arith.addf %2, %4 : vector<16x128xf32>
    %cst_5 = arith.constant 0.000000e+00 : f32
    %6 = vector.broadcast %cst_5 : f32 to vector<16x128xf32>
    %7 = arith.maximumf %5, %6 : vector<16x128xf32>
    %c0_6 = arith.constant 0 : index
    %c0_7 = arith.constant 0 : index
    %8 = vector.load %arg4[%c0_6, %c0_7] : memref<16x16xf32, #tpu.memory_space<vmem>>, vector<16x16xf32>
    %cst_8 = arith.constant dense<0.000000e+00> : vector<16x128xf32>
    %9 = tpu.matmul %8, %7, %cst_8 {dimension_numbers = #tpu.dot_dimension_numbers<[1], [0], [0], [1], [0, 0, 1, 1], [], []>} : vector<16x16xf32>, vector<16x128xf32>, vector<16x128xf32> -> vector<16x128xf32>
    %c0_9 = arith.constant 0 : index
    %c0_10 = arith.constant 0 : index
    %10 = vector.load %arg5[%c0_9, %c0_10] : memref<16x1xf32, #tpu.memory_space<vmem>>, vector<16x1xf32>
    %11 = vector.broadcast %10 : vector<16x1xf32> to vector<16x128xf32>
    %12 = arith.addf %9, %11 : vector<16x128xf32>
    %cst_11 = arith.constant 0.000000e+00 : f32
    %13 = vector.broadcast %cst_11 : f32 to vector<16x128xf32>
    %14 = arith.maximumf %12, %13 : vector<16x128xf32>
    %c0_12 = arith.constant 0 : index
    %c0_13 = arith.constant 0 : index
    %15 = vector.load %arg6[%c0_12, %c0_13] : memref<10x16xf32, #tpu.memory_space<vmem>>, vector<10x16xf32>
    %cst_14 = arith.constant dense<0.000000e+00> : vector<10x128xf32>
    %16 = tpu.matmul %15, %14, %cst_14 {dimension_numbers = #tpu.dot_dimension_numbers<[1], [0], [0], [1], [0, 0, 1, 1], [], []>} : vector<10x16xf32>, vector<16x128xf32>, vector<10x128xf32> -> vector<10x128xf32>
    %c0_15 = arith.constant 0 : index
    %c0_16 = arith.constant 0 : index
    %17 = vector.load %arg7[%c0_15, %c0_16] : memref<10x1xf32, #tpu.memory_space<vmem>>, vector<10x1xf32>
    %18 = vector.broadcast %17 : vector<10x1xf32> to vector<10x128xf32>
    %19 = arith.addf %16, %18 : vector<10x128xf32>
    %c0_17 = arith.constant 0 : index
    %c0_18 = arith.constant 0 : index
    %20 = vector.load %arg8[%c0_17, %c0_18] : memref<10x128xf32, #tpu.memory_space<vmem>>, vector<10x128xf32>
    tpu.vector_store %arg8[%c0_17, %c0_18], %19 {strides = array<i32>} : memref<10x128xf32, #tpu.memory_space<vmem>>, vector<10x128xf32>,
    return
  }
  func.func @transform_0(%arg0: i32) -> (i32, i32) {
    %c0_i32 = arith.constant 0 : i32
    %c0_i32_0 = arith.constant 0 : i32
    return %c0_i32, %arg0 : i32, i32
  }
  func.func @transform_1(%arg0: i32) -> (i32, i32) {
    %c0_i32 = arith.constant 0 : i32
    %c0_i32_0 = arith.constant 0 : i32
    %c0_i32_1 = arith.constant 0 : i32
    return %c0_i32, %c0_i32_0 : i32, i32
  }
  func.func @transform_2(%arg0: i32) -> (i32, i32) {
    %c0_i32 = arith.constant 0 : i32
    %c0_i32_0 = arith.constant 0 : i32
    %c0_i32_1 = arith.constant 0 : i32
    return %c0_i32, %c0_i32_0 : i32, i32
  }
  func.func @transform_3(%arg0: i32) -> (i32, i32) {
    %c0_i32 = arith.constant 0 : i32
    %c0_i32_0 = arith.constant 0 : i32
    %c0_i32_1 = arith.constant 0 : i32
    return %c0_i32, %c0_i32_0 : i32, i32
  }
  func.func @transform_4(%arg0: i32) -> (i32, i32) {
    %c0_i32 = arith.constant 0 : i32
    %c0_i32_0 = arith.constant 0 : i32
    %c0_i32_1 = arith.constant 0 : i32
    return %c0_i32, %c0_i32_0 : i32, i32
  }
  func.func @transform_5(%arg0: i32) -> (i32, i32) {
    %c0_i32 = arith.constant 0 : i32
    %c0_i32_0 = arith.constant 0 : i32
    %c0_i32_1 = arith.constant 0 : i32
    return %c0_i32, %c0_i32_0 : i32, i32
  }
  func.func @transform_6(%arg0: i32) -> (i32, i32) {
    %c0_i32 = arith.constant 0 : i32
    %c0_i32_0 = arith.constant 0 : i32
    %c0_i32_1 = arith.constant 0 : i32
    return %c0_i32, %c0_i32_0 : i32, i32
  }
  func.func @transform_7(%arg0: i32) -> (i32, i32) {
    %c0_i32 = arith.constant 0 : i32
    %c0_i32_0 = arith.constant 0 : i32
    return %c0_i32, %arg0 : i32, i32
  }
}

</mosaic_0001>

<llo_original>
// kernel: tpu_custom_call.1
$region0: #{tpu_custom_call.1}
  #allocation0 [shape = 'u32[]', space=smem, size = 0x4, offset = 0x4, fixed_abs, tag = 'smem constant byte address 0x4 - core index']
  #allocation1 [shape = 'u32[144,128]{1,0:T(1,128)}', space=vmem, size = 0x12000, scoped, tag = 'internal scratch']
  %s0 = inlined_call_operand.vmem [shape: f32[10,256], index: 0, kind: input, shape index: {}]
  %s1 = inlined_call_operand.vmem [shape: f32[16,10], index: 1, kind: input, shape index: {}]
  %s2 = inlined_call_operand.vmem [shape: f32[16,1], index: 2, kind: input, shape index: {}]
  %s3 = inlined_call_operand.hbm [shape: f32[16,16], index: 3, kind: input, shape index: {}]
  %s4 = inlined_call_operand.vmem [shape: f32[16,1], index: 4, kind: input, shape index: {}]
  %s5 = inlined_call_operand.hbm [shape: f32[10,16], index: 5, kind: input, shape index: {}]
  %s6 = inlined_call_operand.vmem [shape: f32[10,1], index: 6, kind: input, shape index: {}]
  %s7 = inlined_call_operand.hbm [shape: f32[10,256], index: 7, kind: output, shape index: {}]
  %s8 = sld [smem:[#allocation0]]
  $region107: #{tpu_custom_call.1} parent=0
    _
  %s10 = ssub.s32 1, %s8
  %s11 = scalar_select 0, %s10, %s8
  $region1: #{tpu_custom_call.1} parent=0
    #allocation2 [shape = 'u8[16384]{0}', space=vmem, size = 0x4000, scoped, tag = 'input window, operand 0']
    #allocation3 [shape = 'u8[8192]{0}', space=vmem, size = 0x2000, scoped, tag = 'input window, operand 3, single buffered']
    #allocation4 [shape = 's32[2]{0}', space=sflag, size = 0x8, scoped, tag = 'scoped memory for tpu_custom_call.1']
    #allocation5 [shape = 's32[2]{0}', space=sflag, size = 0x8, scoped, tag = 'scoped memory for tpu_custom_call.1']
    #allocation6 [shape = 'u8[8192]{0}', space=vmem, size = 0x2000, scoped, tag = 'input window, operand 5, single buffered']
    #allocation7 [shape = 's32[1]{0}', space=sflag, size = 0x4, scoped, tag = 'scoped memory for tpu_custom_call.1']
    #allocation8 [shape = 'u8[16384]{0}', space=vmem, size = 0x4000, scoped, tag = 'output window, operand 0']
    %12 = vsyncpa [#allocation4], 0
    %13 = vsyncpa [#allocation7], 0
    %14 = vsyncpa [#allocation5], 0
    %s15 = scalar_lea.sflag [#allocation5], 1
    %16 = vsyncpa %s15, 0
    loop: start=0, step=1, limit=4
    $region2: #{tpu_custom_call.1} parent=1 // loop_pre_header
      _
    $region3: #{tpu_custom_call.1} parent=1 // loop_header
      %s18 = sphi 0, %s22
      %p19 = scmp.ge.s32.totalorder %s18, 4
      %s28 = sphi 0, %s30
      %s31 = sphi 0, %s28
      %s32 = sphi 0, %s31
      %s48 = sphi 0, %s32
      %s52 = sphi 0, %s52
      %s54 = sphi 0, %s52
      %s55 = sphi 0, %s54
      %s69 = sphi 0, %s55
      %s73 = sphi 0, %s73
      %s75 = sphi 0, %s73
      %s76 = sphi 0, %s75
      %s90 = sphi 0, %s76
      %s94 = sphi 0, %s94
      %s96 = sphi 0, %s94
      %s97 = sphi 0, %s96
      %s111 = sphi 0, %s97
      %s115 = sphi 0, %s115
      %s117 = sphi 0, %s115
      %s118 = sphi 0, %s117
      %s132 = sphi 0, %s118
      %s136 = sphi 0, %s136
      %s138 = sphi 0, %s136
      %s139 = sphi 0, %s138
      %s153 = sphi 0, %s139
      %s157 = sphi 0, %s157
      %s159 = sphi 0, %s157
      %s160 = sphi 0, %s159
      %s174 = sphi 0, %s160
      %s180 = sphi 0, %s182
      %s183 = sphi 0, %s180
      %s184 = sphi 0, %s183
      %s200 = sphi 0, %s184
    $region4: #{tpu_custom_call.1} parent=1 // loop_header_branch
      %21 = sbr.rel (%p19) target = $region8
    $region5: #{tpu_custom_call.1} parent=1 // loop_body
      %s23 = ssub.s32 %s18, 1
      %s24 = ssub.s32 %s18, 2
      %s25 = sadd.s32 %s18, 1
      %s26 = ssub.s32 %s18, %s25
      %p27 = scmp.eq.s32.totalorder %s26, 0
      %s29 = sadd.s32 %s28, 1
      %s30 = scalar_select %p27, %s28, %s29
      %p33 = pneg %p27
      %p34 = scmp.eq.s32.totalorder %s18, 1
      %p35 = por %p33, %p34
      %p36 = scmp.ne.s32.totalorder %s28, %s31
      %p37 = scmp.eq.s32.totalorder %s18, 0
      %p38 = por %p36, %p37
      %p39 = scmp.ne.s32.totalorder %s28, %s31
      %p40 = scmp.eq.s32.totalorder %s23, 1
      %p41 = por %p39, %p40
      %p42 = scmp.ne.s32.totalorder %s31, %s32
      %p43 = scmp.eq.s32.totalorder %s23, 0
      %p44 = por %p42, %p43
      %p45 = scmp.ne.s32.totalorder %s31, %s32
      %p46 = scmp.eq.s32.totalorder %s24, 1
      %p47 = por %p45, %p46
      %p49 = scmp.ne.s32.totalorder %s32, %s48
      %p50 = scmp.eq.s32.totalorder %s24, 0
      %p51 = por %p49, %p50
      %s53 = sadd.s32 %s52, 1
      %p56 = scmp.eq.s32.totalorder %s18, 1
      %p57 = scmp.ne.s32.totalorder %s52, %s54
      %p58 = scmp.eq.s32.totalorder %s18, 0
      %p59 = por %p57, %p58
      %p60 = scmp.ne.s32.totalorder %s52, %s54
      %p61 = scmp.eq.s32.totalorder %s23, 1
      %p62 = por %p60, %p61
      %p63 = scmp.ne.s32.totalorder %s54, %s55
      %p64 = scmp.eq.s32.totalorder %s23, 0
      %p65 = por %p63, %p64
      %p66 = scmp.ne.s32.totalorder %s54, %s55
      %p67 = scmp.eq.s32.totalorder %s24, 1
      %p68 = por %p66, %p67
      %p70 = scmp.ne.s32.totalorder %s55, %s69
      %p71 = scmp.eq.s32.totalorder %s24, 0
      %p72 = por %p70, %p71
      %s74 = sadd.s32 %s73, 1
      %p77 = scmp.eq.s32.totalorder %s18, 1
      %p78 = scmp.ne.s32.totalorder %s73, %s75
      %p79 = scmp.eq.s32.totalorder %s18, 0
      %p80 = por %p78, %p79
      %p81 = scmp.ne.s32.totalorder %s73, %s75
      %p82 = scmp.eq.s32.totalorder %s23, 1
      %p83 = por %p81, %p82
      %p84 = scmp.ne.s32.totalorder %s75, %s76
      %p85 = scmp.eq.s32.totalorder %s23, 0
      %p86 = por %p84, %p85
      %p87 = scmp.ne.s32.totalorder %s75, %s76
      %p88 = scmp.eq.s32.totalorder %s24, 1
      %p89 = por %p87, %p88
      %p91 = scmp.ne.s32.totalorder %s76, %s90
      %p92 = scmp.eq.s32.totalorder %s24, 0
      %p93 = por %p91, %p92
      %s95 = sadd.s32 %s94, 1
      %p98 = scmp.eq.s32.totalorder %s18, 1
      %p99 = scmp.ne.s32.totalorder %s94, %s96
      %p100 = scmp.eq.s32.totalorder %s18, 0
      %p101 = por %p99, %p100
      %p102 = scmp.ne.s32.totalorder %s94, %s96
      %p103 = scmp.eq.s32.totalorder %s23, 1
      %p104 = por %p102, %p103
      %p105 = scmp.ne.s32.totalorder %s96, %s97
      %p106 = scmp.eq.s32.totalorder %s23, 0
      %p107 = por %p105, %p106
      %p108 = scmp.ne.s32.totalorder %s96, %s97
      %p109 = scmp.eq.s32.totalorder %s24, 1
      %p110 = por %p108, %p109
      %p112 = scmp.ne.s32.totalorder %s97, %s111
      %p113 = scmp.eq.s32.totalorder %s24, 0
      %p114 = por %p112, %p113
      %s116 = sadd.s32 %s115, 1
      %p119 = scmp.eq.s32.totalorder %s18, 1
      %p120 = scmp.ne.s32.totalorder %s115, %s117
      %p121 = scmp.eq.s32.totalorder %s18, 0
      %p122 = por %p120, %p121
      %p123 = scmp.ne.s32.totalorder %s115, %s117
      %p124 = scmp.eq.s32.totalorder %s23, 1
      %p125 = por %p123, %p124
      %p126 = scmp.ne.s32.totalorder %s117, %s118
      %p127 = scmp.eq.s32.totalorder %s23, 0
      %p128 = por %p126, %p127
      %p129 = scmp.ne.s32.totalorder %s117, %s118
      %p130 = scmp.eq.s32.totalorder %s24, 1
      %p131 = por %p129, %p130
      %p133 = scmp.ne.s32.totalorder %s118, %s132
      %p134 = scmp.eq.s32.totalorder %s24, 0
      %p135 = por %p133, %p134
      %s137 = sadd.s32 %s136, 1
      %p140 = scmp.eq.s32.totalorder %s18, 1
      %p141 = scmp.ne.s32.totalorder %s136, %s138
      %p142 = scmp.eq.s32.totalorder %s18, 0
      %p143 = por %p141, %p142
      %p144 = scmp.ne.s32.totalorder %s136, %s138
      %p145 = scmp.eq.s32.totalorder %s23, 1
      %p146 = por %p144, %p145
      %p147 = scmp.ne.s32.totalorder %s138, %s139
      %p148 = scmp.eq.s32.totalorder %s23, 0
      %p149 = por %p147, %p148
      %p150 = scmp.ne.s32.totalorder %s138, %s139
      %p151 = scmp.eq.s32.totalorder %s24, 1
      %p152 = por %p150, %p151
      %p154 = scmp.ne.s32.totalorder %s139, %s153
      %p155 = scmp.eq.s32.totalorder %s24, 0
      %p156 = por %p154, %p155
      %s158 = sadd.s32 %s157, 1
      %p161 = scmp.eq.s32.totalorder %s18, 1
      %p162 = scmp.ne.s32.totalorder %s157, %s159
      %p163 = scmp.eq.s32.totalorder %s18, 0
      %p164 = por %p162, %p163
      %p165 = scmp.ne.s32.totalorder %s157, %s159
      %p166 = scmp.eq.s32.totalorder %s23, 1
      %p167 = por %p165, %p166
      %p168 = scmp.ne.s32.totalorder %s159, %s160
      %p169 = scmp.eq.s32.totalorder %s23, 0
      %p170 = por %p168, %p169
      %p171 = scmp.ne.s32.totalorder %s159, %s160
      %p172 = scmp.eq.s32.totalorder %s24, 1
      %p173 = por %p171, %p172
      %p175 = scmp.ne.s32.totalorder %s160, %s174
      %p176 = scmp.eq.s32.totalorder %s24, 0
      %p177 = por %p175, %p176
      %s178 = ssub.s32 %s18, %s25
      %p179 = scmp.eq.s32.totalorder %s178, 0
      %s181 = sadd.s32 %s180, 1
      %s182 = scalar_select %p179, %s180, %s181
      %p185 = pneg %p179
      %p186 = scmp.eq.s32.totalorder %s18, 1
      %p187 = por %p185, %p186
      %p188 = scmp.ne.s32.totalorder %s180, %s183
      %p189 = scmp.eq.s32.totalorder %s18, 0
      %p190 = por %p188, %p189
      %p191 = scmp.ne.s32.totalorder %s180, %s183
      %p192 = scmp.eq.s32.totalorder %s23, 1
      %p193 = por %p191, %p192
      %p194 = scmp.ne.s32.totalorder %s183, %s184
      %p195 = scmp.eq.s32.totalorder %s23, 0
      %p196 = por %p194, %p195
      %p197 = scmp.ne.s32.totalorder %s183, %s184
      %p198 = scmp.eq.s32.totalorder %s24, 1
      %p199 = por %p197, %p198
      %p201 = scmp.ne.s32.totalorder %s184, %s200
      %p202 = scmp.eq.s32.totalorder %s24, 0
      %p203 = por %p201, %p202
      %p204 = scmp.le.s32.totalorder 1, %s18
      %p205 = scmp.lt.s32.totalorder %s18, 3
      %p206 = pnand %p204, %p205
      %p207 = pneg %p206
      // Predicated region
      $region9: #{tpu_custom_call.1} parent=5 // pred_check
        _
      $region10: #{tpu_custom_call.1} parent=5 // pred_check_branch
        %209 = sbr.rel (%p206) target = $region12
      $region11: #{tpu_custom_call.1} parent=5 // pred_region
        %s210 = ssub.s32 %s18, 1
        // Predicated region
        $region13: #{tpu_custom_call.1} parent=11 // pred_check
          %p211 = pneg %p65
        $region14: #{tpu_custom_call.1} parent=11 // pred_check_branch
          %213 = sbr.rel (%p211) target = $region16
        $region15: #{tpu_custom_call.1} parent=11 // pred_region
          _
        $region16: #{tpu_custom_call.1} parent=11 // pred_fallthru
          _
        // Predicated region
        $region17: #{tpu_custom_call.1} parent=11 // pred_check
          %p214 = pneg %p86
        $region18: #{tpu_custom_call.1} parent=11 // pred_check_branch
          %216 = sbr.rel (%p214) target = $region20
        $region19: #{tpu_custom_call.1} parent=11 // pred_region
          _
        $region20: #{tpu_custom_call.1} parent=11 // pred_fallthru
          _
        // Predicated region
        $region21: #{tpu_custom_call.1} parent=11 // pred_check
          %p217 = pneg %p107
        $region22: #{tpu_custom_call.1} parent=11 // pred_check_branch
          %219 = sbr.rel (%p217) target = $region24
        $region23: #{tpu_custom_call.1} parent=11 // pred_region
          %s221 = ssub.s32 256, 256
          %222 = vsyncadd [#allocation4], %s221
          %s223 = sshll.u32 [#allocation3], 4
          %s224 = int_to_ptr.vmem [resolvable:$true] %s223
          %229 = dma.hbm_to_vmem [thread:$0]  %s3, 256, %s224, [#allocation4], 128, 128, 8
        $region24: #{tpu_custom_call.1} parent=11 // pred_fallthru
          _
        // Predicated region
        $region25: #{tpu_custom_call.1} parent=11 // pred_check
          %p230 = pneg %p128
        $region26: #{tpu_custom_call.1} parent=11 // pred_check_branch
          %232 = sbr.rel (%p230) target = $region28
        $region27: #{tpu_custom_call.1} parent=11 // pred_region
          _
        $region28: #{tpu_custom_call.1} parent=11 // pred_fallthru
          _
        // Predicated region
        $region29: #{tpu_custom_call.1} parent=11 // pred_check
          %p233 = pneg %p149
        $region30: #{tpu_custom_call.1} parent=11 // pred_check_branch
          %235 = sbr.rel (%p233) target = $region32
        $region31: #{tpu_custom_call.1} parent=11 // pred_region
          %s237 = ssub.s32 256, 256
          %238 = vsyncadd [#allocation7], %s237
          %s239 = sshll.u32 [#allocation6], 4
          %s240 = int_to_ptr.vmem [resolvable:$true] %s239
          %245 = dma.hbm_to_vmem [thread:$0]  %s5, 256, %s240, [#allocation7], 128, 128, 8
        $region32: #{tpu_custom_call.1} parent=11 // pred_fallthru
          _
        // Predicated region
        $region33: #{tpu_custom_call.1} parent=11 // pred_check
          %p246 = pneg %p170
        $region34: #{tpu_custom_call.1} parent=11 // pred_check_branch
          %248 = sbr.rel (%p246) target = $region36
        $region35: #{tpu_custom_call.1} parent=11 // pred_region
          _
        $region36: #{tpu_custom_call.1} parent=11 // pred_fallthru
          _
      $region12: #{tpu_custom_call.1} parent=5 // pred_fallthru
        _
      %p249 = scmp.lt.s32.totalorder %s18, 2
      // Predicated region
      $region37: #{tpu_custom_call.1} parent=5 // pred_check
        %p250 = pneg %p249
      $region38: #{tpu_custom_call.1} parent=5 // pred_check_branch
        %252 = sbr.rel (%p250) target = $region40
      $region39: #{tpu_custom_call.1} parent=5 // pred_region
        // Predicated region
        $region41: #{tpu_custom_call.1} parent=39 // pred_check
          %p253 = pneg %p38
        $region42: #{tpu_custom_call.1} parent=39 // pred_check_branch
          %255 = sbr.rel (%p253) target = $region44
        $region43: #{tpu_custom_call.1} parent=39 // pred_region
          %s256 = sand.u32 %s28, 1
          %s257 = sand.u32 %s28, 1
          %s258 = smul.addr %s257, 16
          %s259 = scalar_lea.vmem [#allocation2], %s258
          %s260 = smul.addr %s18, 8
          %s261 = scalar_lea.vmem %s0, %s260
          // Predicated region
          $region45: #{tpu_custom_call.1} parent=43 // pred_check
            _
          $region46: #{tpu_custom_call.1} parent=43 // pred_check_branch
            %263 = sbr.rel (0) target = $region48
          $region47: #{tpu_custom_call.1} parent=43 // pred_region
            // Predicated region
            $region49: #{tpu_custom_call.1} parent=47 // pred_check
              _
            $region50: #{tpu_custom_call.1} parent=47 // pred_check_branch
              %265 = sbr.rel (0) target = $region52
            $region51: #{tpu_custom_call.1} parent=47 // pred_region
              // Predicated region
              $region64: #{tpu_custom_call.1} parent=51 // pred_check
                _
              $region65: #{tpu_custom_call.1} parent=51 // pred_check_branch
                %283 = sbr.rel (0) target = $region67
              $region66: #{tpu_custom_call.1} parent=51 // pred_region
                loop: start=0, step=1, limit=1
                $region68: #{tpu_custom_call.1} parent=66 // loop_pre_header
                  _
                $region69: #{tpu_custom_call.1} parent=66 // loop_header
                  %s285 = sphi 0, %s289
                  %p286 = scmp.ge.s32.totalorder %s285, 1
                  %s290 = sphi %s261, %s261
                  %s291 = sphi %s259, %s259
                $region70: #{tpu_custom_call.1} parent=66 // loop_header_branch
                  %288 = sbr.rel (%p286) target = $region74
                $region71: #{tpu_custom_call.1} parent=66 // loop_body
                  %v292 = vld [vmem:[%s290] sm:$0xff]
                  %293 = vst [vmem:[%s291] sm:$0xff] %v292
                  %v294 = vld [vmem:[%s290 + $0x10] sm:$0xff]
                  %295 = vst [vmem:[%s291 + $0x8] sm:$0xff] %v294
                $region72: #{tpu_custom_call.1} parent=66 // loop_footer
                  %s289 = sadd.s32 1, %s285
                $region73: #{tpu_custom_call.1} parent=66 // loop_footer_branch
                  %284 = sbr.rel target = $region69
                $region74: #{tpu_custom_call.1} parent=66 // loop_exit
                  _
              $region67: #{tpu_custom_call.1} parent=51 // pred_fallthru
                _
              // Predicated region
              $region75: #{tpu_custom_call.1} parent=51 // pred_check
                _
              $region76: #{tpu_custom_call.1} parent=51 // pred_check_branch
                %297 = sbr.rel target = $region78
              $region77: #{tpu_custom_call.1} parent=51 // pred_region
                _
              $region78: #{tpu_custom_call.1} parent=51 // pred_fallthru
                _
            $region52: #{tpu_custom_call.1} parent=47 // pred_fallthru
              _
            // Predicated region
            $region53: #{tpu_custom_call.1} parent=47 // pred_check
              _
            $region54: #{tpu_custom_call.1} parent=47 // pred_check_branch
              %267 = sbr.rel target = $region56
            $region55: #{tpu_custom_call.1} parent=47 // pred_region
              %s269 = ssub.s32 256, 1
              loop: start=0, step=1, limit=1
              $region57: #{tpu_custom_call.1} parent=55 // loop_pre_header
                _
              $region58: #{tpu_custom_call.1} parent=55 // loop_header
                %s271 = sphi 0, %s275
                %p272 = scmp.ge.s32.totalorder %s271, 1
                %s276 = sphi %s261, %s261
                %s277 = sphi %s259, %s259
              $region59: #{tpu_custom_call.1} parent=55 // loop_header_branch
                %274 = sbr.rel (%p272) target = $region63
              $region60: #{tpu_custom_call.1} parent=55 // loop_body
                %v278 = vld [vmem:[%s276] sm:%s269]
                %279 = vst [vmem:[%s277] sm:%s269] %v278
                %v280 = vld [vmem:[%s276 + $0x10] sm:%s269]
                %281 = vst [vmem:[%s277 + $0x8] sm:%s269] %v280
              $region61: #{tpu_custom_call.1} parent=55 // loop_footer
                %s275 = sadd.s32 1, %s271
              $region62: #{tpu_custom_call.1} parent=55 // loop_footer_branch
                %270 = sbr.rel target = $region58
              $region63: #{tpu_custom_call.1} parent=55 // loop_exit
                _
            $region56: #{tpu_custom_call.1} parent=47 // pred_fallthru
              _
          $region48: #{tpu_custom_call.1} parent=43 // pred_fallthru
            _
          %298 = vnop
        $region44: #{tpu_custom_call.1} parent=39 // pred_fallthru
          _
      $region40: #{tpu_custom_call.1} parent=5 // pred_fallthru
        _
      %p299 = scmp.le.s32.totalorder 1, %s18
      %p300 = scmp.lt.s32.totalorder %s18, 3
      %p301 = pnand %p299, %p300
      %p302 = pneg %p301
      // Predicated region
      $region79: #{tpu_custom_call.1} parent=5 // pred_check
        _
      $region80: #{tpu_custom_call.1} parent=5 // pred_check_branch
        %304 = sbr.rel (%p301) target = $region82
      $region81: #{tpu_custom_call.1} parent=5 // pred_region
        %s305 = ssub.s32 %s18, 1
        %s306 = sand.u32 %s31, 1
        %s307 = sand.u32 %s31, 1
        %s308 = smul.addr %s307, 16
        %s309 = scalar_lea.vmem [#allocation2], %s308
        // Predicated region
        $region83: #{tpu_custom_call.1} parent=81 // pred_check
          %p310 = pneg %p44
        $region84: #{tpu_custom_call.1} parent=81 // pred_check_branch
          %312 = sbr.rel (%p310) target = $region86
        $region85: #{tpu_custom_call.1} parent=81 // pred_region
          _
        $region86: #{tpu_custom_call.1} parent=81 // pred_fallthru
          _
        // Predicated region
        $region87: #{tpu_custom_call.1} parent=81 // pred_check
          %p313 = pneg %p107
        $region88: #{tpu_custom_call.1} parent=81 // pred_check_branch
          %315 = sbr.rel (%p313) target = $region90
        $region89: #{tpu_custom_call.1} parent=81 // pred_region
          %316 = dma.done [#allocation4], 256
        $region90: #{tpu_custom_call.1} parent=81 // pred_fallthru
          _
        // Predicated region
        $region91: #{tpu_custom_call.1} parent=81 // pred_check
          %p317 = pneg %p149
        $region92: #{tpu_custom_call.1} parent=81 // pred_check_branch
          %319 = sbr.rel (%p317) target = $region94
        $region93: #{tpu_custom_call.1} parent=81 // pred_region
          %320 = dma.done [#allocation7], 256
        $region94: #{tpu_custom_call.1} parent=81 // pred_fallthru
          _
        %s321 = sand.u32 %s31, 1
        %s322 = sand.u32 %s31, 1
        %s323 = smul.addr %s322, 16
        %s324 = scalar_lea.vmem [#allocation2], %s323
        %p325 = pneg %p44
        %p326 = pneg %p41
        %p327 = pneg %p65
        %p328 = pneg %p62
        %p329 = pneg %p86
        %p330 = pneg %p83
        %p331 = pneg %p107
        %p332 = pneg %p104
        %p333 = pneg %p128
        %p334 = pneg %p125
        %p335 = pneg %p149
        %p336 = pneg %p146
        %p337 = pneg %p170
        %p338 = pneg %p167
        %p339 = pneg %p196
        %p340 = pneg %p193
        %s341 = sand.u32 %s183, 1
        %s342 = scalar_lea.sflag [#allocation5], %s341
        %s343 = sand.u32 %s183, 1
        %s344 = smul.addr %s343, 16
        %s345 = scalar_lea.vmem [#allocation8], %s344
        %v346 = vld [vmem:[%s309] sm:$0xff]
        %v347 = vld [vmem:[%s309 + $0x8] sm:$0x3]
        %v348 = vld [vmem:[%s1] sm:$0xff]
        %v349 = vld [vmem:[%s1 + $0x8] sm:$0xff]
        %v350 = vld [vmem:[%s2] sm:$0xff]
        %v351 = vld [vmem:[%s2 + $0x8] sm:$0xff]
        %353 = vset.pattern.permute.xlu0 0
        %354 = vperm.xlu0 %353, %v350
        %v355 = vpop.permute.xlu0 %354
        %358 = vset.pattern.permute.xlu0 0
        %359 = vperm.xlu0 %358, %v351
        %v360 = vpop.permute.xlu0 %359
        %vm362 = vcmask 80896
        %v364 = vsel %vm362, %v348, 0
        %v367 = vsel %vm362, %v349, 0
        %vm369 = vcmask 1041408
        %v371 = vsel %vm369, %v347, 0
        %373 = vmatprep.subr.mxu0 0.0
        %374 = vmatpush1.msra.mxu0 0.0
        %375 = vmatprep.subr.mxu0 0.0
        %376 = vmatpush1.msra.mxu0 0.0
        %377 = vmatprep.subr.mxu0 0.0
        %378 = vmatpush1.msra.mxu0 0.0
        %379 = vmatprep.subr.mxu0 0.0
        %380 = vmatpush1.msra.mxu0 0.0
        %381 = vmatprep.subr.mxu0 0.0
        %382 = vmatpush1.msra.mxu0 0.0
        %383 = vmatprep.subr.mxu0 0.0
        %384 = vmatpush1.msra.mxu0 0.0
        %385 = vmatprep.subr.mxu0 0.0
        %386 = vmatpush1.msra.mxu0 0.0
        %387 = vmatprep.subr.mxu0 0.0
        %388 = vmatpush1.msra.mxu0 0.0
        %389 = vmatprep.subr.mxu0 0.0
        %390 = vmatpush1.msra.mxu0 0.0
        %391 = vmatprep.subr.mxu0 0.0
        %392 = vmatpush1.msra.mxu0 0.0
        %393 = vmatprep.subr.mxu0 0.0
        %394 = vmatpush1.msra.mxu0 0.0
        %395 = vmatprep.subr.mxu0 0.0
        %396 = vmatpush1.msra.mxu0 0.0
        %397 = vmatprep.subr.mxu0 0.0
        %398 = vmatpush1.msra.mxu0 0.0
        %399 = vmatprep.subr.mxu0 0.0
        %400 = vmatpush1.msra.mxu0 0.0
        %401 = vmatprep.subr.mxu0 0.0
        %402 = vmatpush1.msra.mxu0 %v371
        %403 = vmatprep.subr.mxu0 0.0
        %404 = vmatpush1.msra.mxu0 %v346
        %405 = vmatprep.subr.mxu0 0.0
        %406 = vmatpush2.msra.mxu0 0.0
        %407 = vmatprep.subr.mxu0 0.0
        %408 = vmatpush2.msra.mxu0 0.0
        %409 = vmatprep.subr.mxu0 0.0
        %410 = vmatpush2.msra.mxu0 0.0
        %411 = vmatprep.subr.mxu0 0.0
        %412 = vmatpush2.msra.mxu0 0.0
        %413 = vmatprep.subr.mxu0 0.0
        %414 = vmatpush2.msra.mxu0 0.0
        %415 = vmatprep.subr.mxu0 0.0
        %416 = vmatpush2.msra.mxu0 0.0
        %417 = vmatprep.subr.mxu0 0.0
        %418 = vmatpush2.msra.mxu0 0.0
        %419 = vmatprep.subr.mxu0 0.0
        %420 = vmatpush2.msra.mxu0 0.0
        %421 = vmatprep.subr.mxu0 0.0
        %422 = vmatpush2.msra.mxu0 0.0
        %423 = vmatprep.subr.mxu0 0.0
        %424 = vmatpush2.msra.mxu0 0.0
        %425 = vmatprep.subr.mxu0 0.0
        %426 = vmatpush2.msra.mxu0 0.0
        %427 = vmatprep.subr.mxu0 0.0
        %428 = vmatpush2.msra.mxu0 0.0
        %429 = vmatprep.subr.mxu0 0.0
        %430 = vmatpush2.msra.mxu0 0.0
        %431 = vmatprep.subr.mxu0 0.0
        %432 = vmatpush2.msra.mxu0 0.0
        %433 = vmatprep.subr.mxu0 0.0
        %434 = vmatpush2.msra.mxu0 0.0
        %435 = vmatprep.subr.mxu0 0.0
        %436 = vmatpush2.msra.mxu0 0.0
        %437 = vmatprep.mubr.f32.mxu0 0.0
        %438 = vmatmul.mubr.f32.gmra.mxu0 %v364
        %v439 = vpop.f32.mrf.mxu0
        %v440 = vadd.f32 %v355, %v439
        %v441 = vpop.f32.mrf.mxu0
        %442 = vmatprep.mubr.f32.mxu0 0.0
        %443 = vmatmul.mubr.f32.gmra.mxu0 %v367
        %v444 = vpop.f32.mrf.mxu0
        %v445 = vadd.f32 %v360, %v444
        %v446 = vpop.f32.mrf.mxu0
        %447 = vdwg.mxu0
        %v448 = vmax.f32 %v440, 0.0
        %v449 = vmax.f32 %v445, 0.0
        %v450 = vld [vmem:[#allocation3] sm:$0xff]
        %v451 = vld [vmem:[#allocation3 + $0x8] sm:$0xff]
        %v452 = vld [vmem:[%s4] sm:$0xff]
        %v453 = vld [vmem:[%s4 + $0x8] sm:$0xff]
        %455 = vset.pattern.permute.xlu0 0
        %456 = vperm.xlu0 %455, %v452
        %v457 = vpop.permute.xlu0 %456
        %460 = vset.pattern.permute.xlu0 0
        %461 = vperm.xlu0 %460, %v453
        %v462 = vpop.permute.xlu0 %461
        %vm464 = vcmask 130048
        %v466 = vsel %vm464, %v450, 0
        %v469 = vsel %vm464, %v451, 0
        %471 = vmatprep.subr.mxu0 0.0
        %472 = vmatpush1.msra.mxu0 0.0
        %473 = vmatprep.subr.mxu0 0.0
        %474 = vmatpush1.msra.mxu0 0.0
        %475 = vmatprep.subr.mxu0 0.0
        %476 = vmatpush1.msra.mxu0 0.0
        %477 = vmatprep.subr.mxu0 0.0
        %478 = vmatpush1.msra.mxu0 0.0
        %479 = vmatprep.subr.mxu0 0.0
        %480 = vmatpush1.msra.mxu0 0.0
        %481 = vmatprep.subr.mxu0 0.0
        %482 = vmatpush1.msra.mxu0 0.0
        %483 = vmatprep.subr.mxu0 0.0
        %484 = vmatpush1.msra.mxu0 0.0
        %485 = vmatprep.subr.mxu0 0.0
        %486 = vmatpush1.msra.mxu0 0.0
        %487 = vmatprep.subr.mxu0 0.0
        %488 = vmatpush1.msra.mxu0 0.0
        %489 = vmatprep.subr.mxu0 0.0
        %490 = vmatpush1.msra.mxu0 0.0
        %491 = vmatprep.subr.mxu0 0.0
        %492 = vmatpush1.msra.mxu0 0.0
        %493 = vmatprep.subr.mxu0 0.0
        %494 = vmatpush1.msra.mxu0 0.0
        %495 = vmatprep.subr.mxu0 0.0
        %496 = vmatpush1.msra.mxu0 0.0
        %497 = vmatprep.subr.mxu0 0.0
        %498 = vmatpush1.msra.mxu0 0.0
        %499 = vmatprep.subr.mxu0 0.0
        %500 = vmatpush1.msra.mxu0 %v449
        %501 = vmatprep.subr.mxu0 0.0
        %502 = vmatpush1.msra.mxu0 %v448
        %503 = vmatprep.subr.mxu0 0.0
        %504 = vmatpush2.msra.mxu0 0.0
        %505 = vmatprep.subr.mxu0 0.0
        %506 = vmatpush2.msra.mxu0 0.0
        %507 = vmatprep.subr.mxu0 0.0
        %508 = vmatpush2.msra.mxu0 0.0
        %509 = vmatprep.subr.mxu0 0.0
        %510 = vmatpush2.msra.mxu0 0.0
        %511 = vmatprep.subr.mxu0 0.0
        %512 = vmatpush2.msra.mxu0 0.0
        %513 = vmatprep.subr.mxu0 0.0
        %514 = vmatpush2.msra.mxu0 0.0
        %515 = vmatprep.subr.mxu0 0.0
        %516 = vmatpush2.msra.mxu0 0.0
        %517 = vmatprep.subr.mxu0 0.0
        %518 = vmatpush2.msra.mxu0 0.0
        %519 = vmatprep.subr.mxu0 0.0
        %520 = vmatpush2.msra.mxu0 0.0
        %521 = vmatprep.subr.mxu0 0.0
        %522 = vmatpush2.msra.mxu0 0.0
        %523 = vmatprep.subr.mxu0 0.0
        %524 = vmatpush2.msra.mxu0 0.0
        %525 = vmatprep.subr.mxu0 0.0
        %526 = vmatpush2.msra.mxu0 0.0
        %527 = vmatprep.subr.mxu0 0.0
        %528 = vmatpush2.msra.mxu0 0.0
        %529 = vmatprep.subr.mxu0 0.0
        %530 = vmatpush2.msra.mxu0 0.0
        %531 = vmatprep.subr.mxu0 0.0
        %532 = vmatpush2.msra.mxu0 0.0
        %533 = vmatprep.subr.mxu0 0.0
        %534 = vmatpush2.msra.mxu0 0.0
        %535 = vmatprep.mubr.f32.mxu0 0.0
        %536 = vmatmul.mubr.f32.gmra.mxu0 %v466
        %v537 = vpop.f32.mrf.mxu0
        %v538 = vadd.f32 %v457, %v537
        %v539 = vpop.f32.mrf.mxu0
        %540 = vmatprep.mubr.f32.mxu0 0.0
        %541 = vmatmul.mubr.f32.gmra.mxu0 %v469
        %v542 = vpop.f32.mrf.mxu0
        %v543 = vadd.f32 %v462, %v542
        %v544 = vpop.f32.mrf.mxu0
        %545 = vdwg.mxu0
        %v546 = vmax.f32 %v538, 0.0
        %v547 = vmax.f32 %v543, 0.0
        %v548 = vld [vmem:[#allocation6] sm:$0xff]
        %v549 = vld [vmem:[#allocation6 + $0x8] sm:$0x3]
        %v550 = vld [vmem:[%s6] sm:$0xff]
        %v551 = vld [vmem:[%s6 + $0x8] sm:$0x3]
        %553 = vset.pattern.permute.xlu0 0
        %554 = vperm.xlu0 %553, %v550
        %v555 = vpop.permute.xlu0 %554
        %558 = vset.pattern.permute.xlu0 0
        %559 = vperm.xlu0 %558, %v551
        %v560 = vpop.permute.xlu0 %559
        %v563 = vsel %vm464, %v548, 0
        %v566 = vsel %vm464, %v549, 0
        %568 = vmatprep.subr.mxu0 0.0
        %569 = vmatpush1.msra.mxu0 0.0
        %570 = vmatprep.subr.mxu0 0.0
        %571 = vmatpush1.msra.mxu0 0.0
        %572 = vmatprep.subr.mxu0 0.0
        %573 = vmatpush1.msra.mxu0 0.0
        %574 = vmatprep.subr.mxu0 0.0
        %575 = vmatpush1.msra.mxu0 0.0
        %576 = vmatprep.subr.mxu0 0.0
        %577 = vmatpush1.msra.mxu0 0.0
        %578 = vmatprep.subr.mxu0 0.0
        %579 = vmatpush1.msra.mxu0 0.0
        %580 = vmatprep.subr.mxu0 0.0
        %581 = vmatpush1.msra.mxu0 0.0
        %582 = vmatprep.subr.mxu0 0.0
        %583 = vmatpush1.msra.mxu0 0.0
        %584 = vmatprep.subr.mxu0 0.0
        %585 = vmatpush1.msra.mxu0 0.0
        %586 = vmatprep.subr.mxu0 0.0
        %587 = vmatpush1.msra.mxu0 0.0
        %588 = vmatprep.subr.mxu0 0.0
        %589 = vmatpush1.msra.mxu0 0.0
        %590 = vmatprep.subr.mxu0 0.0
        %591 = vmatpush1.msra.mxu0 0.0
        %592 = vmatprep.subr.mxu0 0.0
        %593 = vmatpush1.msra.mxu0 0.0
        %594 = vmatprep.subr.mxu0 0.0
        %595 = vmatpush1.msra.mxu0 0.0
        %596 = vmatprep.subr.mxu0 0.0
        %597 = vmatpush1.msra.mxu0 %v547
        %598 = vmatprep.subr.mxu0 0.0
        %599 = vmatpush1.msra.mxu0 %v546
        %600 = vmatprep.subr.mxu0 0.0
        %601 = vmatpush2.msra.mxu0 0.0
        %602 = vmatprep.subr.mxu0 0.0
        %603 = vmatpush2.msra.mxu0 0.0
        %604 = vmatprep.subr.mxu0 0.0
        %605 = vmatpush2.msra.mxu0 0.0
        %606 = vmatprep.subr.mxu0 0.0
        %607 = vmatpush2.msra.mxu0 0.0
        %608 = vmatprep.subr.mxu0 0.0
        %609 = vmatpush2.msra.mxu0 0.0
        %610 = vmatprep.subr.mxu0 0.0
        %611 = vmatpush2.msra.mxu0 0.0
        %612 = vmatprep.subr.mxu0 0.0
        %613 = vmatpush2.msra.mxu0 0.0
        %614 = vmatprep.subr.mxu0 0.0
        %615 = vmatpush2.msra.mxu0 0.0
        %616 = vmatprep.subr.mxu0 0.0
        %617 = vmatpush2.msra.mxu0 0.0
        %618 = vmatprep.subr.mxu0 0.0
        %619 = vmatpush2.msra.mxu0 0.0
        %620 = vmatprep.subr.mxu0 0.0
        %621 = vmatpush2.msra.mxu0 0.0
        %622 = vmatprep.subr.mxu0 0.0
        %623 = vmatpush2.msra.mxu0 0.0
        %624 = vmatprep.subr.mxu0 0.0
        %625 = vmatpush2.msra.mxu0 0.0
        %626 = vmatprep.subr.mxu0 0.0
        %627 = vmatpush2.msra.mxu0 0.0
        %628 = vmatprep.subr.mxu0 0.0
        %629 = vmatpush2.msra.mxu0 0.0
        %630 = vmatprep.subr.mxu0 0.0
        %631 = vmatpush2.msra.mxu0 0.0
        %632 = vmatprep.mubr.f32.mxu0 0.0
        %633 = vmatmul.mubr.f32.gmra.mxu0 %v563
        %v634 = vpop.f32.mrf.mxu0
        %v635 = vadd.f32 %v555, %v634
        %v636 = vpop.f32.mrf.mxu0
        %637 = vmatprep.mubr.f32.mxu0 0.0
        %638 = vmatmul.mubr.f32.gmra.mxu0 %v566
        %v639 = vpop.f32.mrf.mxu0
        %v640 = vadd.f32 %v560, %v639
        %v641 = vpop.f32.mrf.mxu0
        %642 = vdwg.mxu0
        %643 = vst [vmem:[%s345] sm:$0xff] %v635
        %644 = vst [vmem:[%s345 + $0x8] sm:$0x3] %v640
        %s645 = sand.u32 %s183, 1
        %s646 = scalar_lea.sflag [#allocation5], %s645
        %s647 = sand.u32 %s183, 1
        %s648 = smul.addr %s647, 16
        %s649 = scalar_lea.vmem [#allocation8], %s648
        // Predicated region
        $region95: #{tpu_custom_call.1} parent=81 // pred_check
          %p650 = pneg %p193
        $region96: #{tpu_custom_call.1} parent=81 // pred_check_branch
          %652 = sbr.rel (%p650) target = $region98
        $region97: #{tpu_custom_call.1} parent=81 // pred_region
          %s654 = ssub.s32 256, 256
          %655 = vsyncadd %s646, %s654
          %s656 = smul.addr %s23, 128
          %s657 = scalar_lea.hbm %s7, %s656
          %s658 = sshll.u32 %s649, 4
          %s659 = int_to_ptr.vmem [resolvable:$true] %s658
          %664 = dma.vmem_to_hbm [thread:$0]  %s659, 256, %s657, %s646, 128, 256, 8
        $region98: #{tpu_custom_call.1} parent=81 // pred_fallthru
          _
      $region82: #{tpu_custom_call.1} parent=5 // pred_fallthru
        _
      %p665 = scmp.le.s32.totalorder 2, %s18
      // Predicated region
      $region99: #{tpu_custom_call.1} parent=5 // pred_check
        %p666 = pneg %p665
      $region100: #{tpu_custom_call.1} parent=5 // pred_check_branch
        %668 = sbr.rel (%p666) target = $region102
      $region101: #{tpu_custom_call.1} parent=5 // pred_region
        %s669 = ssub.s32 %s18, 2
        // Predicated region
        $region103: #{tpu_custom_call.1} parent=101 // pred_check
          %p670 = pneg %p199
        $region104: #{tpu_custom_call.1} parent=101 // pred_check_branch
          %672 = sbr.rel (%p670) target = $region106
        $region105: #{tpu_custom_call.1} parent=101 // pred_region
          %s673 = sand.u32 %s184, 1
          %s674 = scalar_lea.sflag [#allocation5], %s673
          %s675 = sand.u32 %s184, 1
          %s676 = smul.addr %s675, 16
          %s677 = scalar_lea.vmem [#allocation8], %s676
          %678 = dma.done %s674, 256
        $region106: #{tpu_custom_call.1} parent=101 // pred_fallthru
          _
      $region102: #{tpu_custom_call.1} parent=5 // pred_fallthru
        _
    $region6: #{tpu_custom_call.1} parent=1 // loop_footer
      %s22 = sadd.s32 1, %s18
    $region7: #{tpu_custom_call.1} parent=1 // loop_footer_branch
      %17 = sbr.rel target = $region3
    $region8: #{tpu_custom_call.1} parent=1 // loop_exit
      _
    %679 = vsyncpa [#allocation4], 1
    %s680 = scalar_lea.sflag [#allocation4], 1
    %681 = vsyncpa %s680, 1
    %682 = vsyncpa [#allocation7], 1
    %683 = vsyncpa [#allocation5], 1
    %s684 = scalar_lea.sflag [#allocation5], 1
    %685 = vsyncpa %s684, 1

</llo_original>
